<compile_context>
chip_gen: v5e
topology: v5e:2x2
jax: 0.10.0
libtpu: 0.0.40
codegen_flags: <defaults>
</compile_context>

<pallas_src>
import functools

import jax
import jax.numpy as jnp
import numpy as np
from jax.experimental import pallas as pl
from jax.experimental.pallas import tpu as pltpu


# ----------------------------------------------------------------------------
# Fused Pallas kernel: whole decoder for one batch block (Nb elements on lanes)
# ----------------------------------------------------------------------------
def _fused_tcn_decoder_kernel(x_ref, *args, layer_meta, nb):
    """x_ref : (1, C0, Nb*L) f32 input block (batch packed along the lane axis)
       args  : w1, b1, ..., w4, b4, o_ref, slab_ref
         w_i : (Cout_i, K*Cin_i) bf16  -- tap-major flattened weights (resident)
         b_i : (Cout_i, 1)       f32
         o_ref    : (1, Cout_last, Nb*L_out) f32
         slab_ref : (max K*Cin, Nb*max L_out) bf16 VMEM scratch
       layer_meta : static tuple of (K, Cin, Cout, dilation, padding, relu)
    """
    *param_refs, o_ref, slab_ref = args

    x = x_ref[0].astype(jnp.bfloat16)             # (C0, Nb*L) bf16 MXU operand
    l_in = x.shape[1] // nb
    y = None
    for i, (k, cin, cout, d, p, relu) in enumerate(layer_meta):
        l_out = l_in - 2 * p + d * (k - 1)        # == l_in for this module
        nbl_out = nb * l_out

        # ---- build the (K*Cin, Nb*L_out) slab directly in VMEM scratch -----
        # slab[j*Cin+ci, n*L_out+t] = x[ci, n*L_in + t + p - j*d]   (0 if OOB)
        for j in range(k):
            s = p - j * d                         # column shift within a block
            r0, r1 = j * cin, (j + 1) * cin
            t0, t1 = max(0, -s), min(l_out, l_in - s)   # valid cols per block
            # One wide shifted copy across all Nb blocks (l_in == l_out), then
            # zero the <=|s| cross-block "bleed"/pad columns of each block.
            c0, c1 = max(0, -s), min(nbl_out, nb * l_in - s)
            slab_ref[r0:r1, c0:c1] = x[:, c0 + s:c1 + s]
            if s != 0:
                for n in range(nb):
                    if t0 > 0:
                        slab_ref[r0:r1, n * l_out:n * l_out + t0] = (
                            jnp.zeros((cin, t0), jnp.bfloat16))
                    if t1 < l_out:
                        slab_ref[r0:r1, n * l_out + t1:(n + 1) * l_out] = (
                            jnp.zeros((cin, l_out - t1), jnp.bfloat16))

        # ---- one lane-dense MXU matmul per layer ----------------------------
        w = param_refs[2 * i][...]                # (Cout, K*Cin) bf16
        b = param_refs[2 * i + 1][...]            # (Cout, 1) f32
        slab = slab_ref[0:k * cin, 0:nbl_out]     # (K*Cin, Nb*L_out) bf16
        y = jnp.dot(w, slab, preferred_element_type=jnp.float32) + b
        if relu:
            y = jnp.maximum(y, 0.0)               # f32 elementwise (v5e-safe)
        x = y.astype(jnp.bfloat16)                # next layer's MXU operand
        l_in = l_out

    o_ref[0] = y.astype(o_ref.dtype)              # lane-dense final store (f32)


# ----------------------------------------------------------------------------
# Parameter packing (one-time) + forward wrapper
# ----------------------------------------------------------------------------
def pack_params(params):
    """Torch-layout ConvTranspose1d params -> MXU-friendly layout:
    W (Cin,Cout,K) -> (Cout, K*Cin) bf16 (tap-major); b -> (Cout,1) f32."""
    flat, meta = [], []
    for prm in params:
        cin, cout, k = prm["w"].shape
        d, pad = prm["dilation"], prm["padding"]
        assert (k - 1) * d - pad >= 0, \
            "padding > (K-1)*dilation is unsupported by the shifted-slab scheme"
        assert (k - 1) * d == 2 * pad, \
            "wide-shift slab build assumes length-preserving ConvTranspose1d " \
            "(padding == (K-1)*dilation/2), which holds for TCN_Decoder"
        wt = jnp.transpose(prm["w"], (1, 2, 0)).reshape(cout, k * cin)
        flat += [wt.astype(jnp.bfloat16),
                 prm["b"].reshape(cout, 1).astype(jnp.float32)]
        meta.append((k, cin, cout, d, pad, prm["relu"]))
    return flat, tuple(meta)


def tcn_decoder_forward(x_ncl, flat_params, layer_meta, *, batch_blocks=1):
    """x_ncl: (N, C, L) f32, C = tcn_layers[1]. Returns (N, input_channels, L).

    batch_blocks: grid steps the batch is split into. Use 1 on v5e/v6e
    (single TensorCore, minimizes per-step overhead); 2 on v7x so both
    TensorCores get a block via the "parallel" grid axis.
    """
    N, C0, L = x_ncl.shape
    assert C0 == layer_meta[0][1]
    assert N % batch_blocks == 0
    nb = N // batch_blocks                 # batch elements packed per grid step
    G = batch_blocks

    # Per-layer output lengths (stay == L for this module's configs).
    l_outs, l = [], L
    for (k, _cin, _cout, d, p, _relu) in layer_meta:
        l = l - 2 * p + d * (k - 1)
        l_outs.append(l)
    L_out = l_outs[-1]
    cout_last = layer_meta[-1][2]

    # Lane packing (layout plumbing in the wrapper): (N, C, L) -> (G, C, Nb*L),
    # batch elements contiguous along the lane axis (column = n*L + t).
    x_blk = x_ncl.reshape(G, nb, C0, L).transpose(0, 2, 1, 3).reshape(G, C0, nb * L)

    in_specs = [pl.BlockSpec((1, C0, nb * L), lambda g: (g, 0, 0))]
    for (k, cin, cout, _d, _p, _relu) in layer_meta:
        # Constant index_map -> weights/biases DMA'd once, stay VMEM-resident.
        # (pl.Buffered(1) pipeline_mode would halve their resident footprint,
        #  omitted: total weight VMEM here is < 30 KiB.)
        in_specs.append(pl.BlockSpec((cout, k * cin), lambda g: (0, 0)))
        in_specs.append(pl.BlockSpec((cout, 1), lambda g: (0, 0)))

    max_rows = max(k * cin for (k, cin, *_rest) in layer_meta)
    max_cols = nb * max(l_outs)

    kernel = functools.partial(_fused_tcn_decoder_kernel,
                               layer_meta=layer_meta, nb=nb)
    out_blk = pl.pallas_call(
        kernel,
        out_shape=jax.ShapeDtypeStruct((G, cout_last, nb * L_out), x_ncl.dtype),
        grid=(G,),
        in_specs=in_specs,
        out_specs=pl.BlockSpec((1, cout_last, nb * L_out), lambda g: (g, 0, 0)),
        scratch_shapes=[pltpu.VMEM((max_rows, max_cols), jnp.bfloat16)],
        compiler_params=pltpu.CompilerParams(dimension_semantics=("parallel",)),
    )(x_blk, *flat_params)

    # Unpack lanes back to (N, Cout, L_out) in the wrapper.
    return out_blk.reshape(G, cout_last, nb, L_out).transpose(0, 2, 1, 3).reshape(
        N, cout_last, L_out)


# ----------------------------------------------------------------------------
# TCN_Decoder configs + parameter init (matches the PyTorch module layout)
# ----------------------------------------------------------------------------
class Configs:
    tcn_kernel_size = 3
    tcn_layers = [16, 32]     # [in_channels1, out_channels1]
    input_channels = 8


def init_params(key, configs):
    k = configs.tcn_kernel_size
    c_in1 = configs.tcn_layers[0]     # 16
    c_out1 = configs.tcn_layers[1]    # 32
    c_in0 = configs.tcn_layers[0]     # 16
    c_out0 = configs.input_channels   # 8
    d1, d0 = 2, 1
    p1 = (k - 1) * d1 // 2
    p0 = (k - 1) * d0 // 2

    # (Cin, Cout, dilation, padding, relu) per ConvTranspose1d layer, matching
    # deconv_block1 then deconv_block2 of the PyTorch module.
    layer_defs = [
        (c_out1, c_in1, d1, p1, True),
        (c_in1, c_in1, d1, p1, True),
        (c_in1, c_in0, d0, p0, True),
        (c_in0, c_out0, d0, p0, False),
    ]
    params = []
    for (cin, cout, dil, pad, relu) in layer_defs:
        key, kw, kb = jax.random.split(key, 3)
        bound = 1.0 / np.sqrt(cin * k)
        w = jax.random.uniform(kw, (cin, cout, k), jnp.float32, -bound, bound)
        b = jax.random.uniform(kb, (cout,), jnp.float32, -bound, bound)
        params.append(dict(w=w, b=b, dilation=dil, padding=pad, relu=relu))
    return params


# ----------------------------------------------------------------------------
# Pure-JAX f32 reference (direct transcription of PyTorch ConvTranspose1d math)
# ----------------------------------------------------------------------------
def _conv_transpose1d_ref(x_ncl, w, b, dilation, padding):
    N, Cin, L_in = x_ncl.shape
    _, Cout, K = w.shape
    L_out = (L_in - 1) - 2 * padding + dilation * (K - 1) + 1
    y = jnp.zeros((N, Cout, L_out), jnp.float32)
    for t in range(L_out):
        for j in range(K):
            src = t + padding - j * dilation
            if 0 <= src < L_in:
                y = y.at[:, :, t].add(
                    jnp.einsum("nc,cd->nd", x_ncl[:, :, src], w[:, :, j]))
    return y + b[None, :, None]


def _tcn_decoder_ref(x_ncl, params):
    x = x_ncl
    for layer in params:
        x = _conv_transpose1d_ref(x, layer["w"], layer["b"],
                                  layer["dilation"], layer["padding"])
        if layer["relu"]:
            x = jnp.maximum(x, 0.0)
    return x


# ----------------------------------------------------------------------------
if __name__ == "__main__":
    configs = Configs()
    key = jax.random.PRNGKey(0)
    key, kx = jax.random.split(key)

    N, L = 2, 16
    C_in = configs.tcn_layers[1]                            # 32
    x = jax.random.normal(kx, (N, C_in, L), jnp.float32)    # (N, C, L)

    params = init_params(key, configs)
    flat_params, layer_meta = pack_params(params)
    ref = _tcn_decoder_ref(x, params)

    # Single grid step: whole batch packed on the lane axis (v5e/v6e default).
    out = jax.block_until_ready(
        tcn_decoder_forward(x, flat_params, layer_meta, batch_blocks=1))
    # bf16 matmul operands with f32 accumulation -> loosened tolerance vs f32 ref.
    np.testing.assert_allclose(np.asarray(out), np.asarray(ref),
                               rtol=2e-2, atol=2e-2)
    assert out.shape == (N, configs.input_channels, L)

    # Two "parallel" grid steps — the v7x dual-TensorCore configuration.
    out2 = jax.block_until_ready(
        tcn_decoder_forward(x, flat_params, layer_meta, batch_blocks=2))
    np.testing.assert_allclose(np.asarray(out2), np.asarray(ref),
                               rtol=2e-2, atol=2e-2)

    print("KERNEL_OK")
</pallas_src>

<mosaic_0001>
module attributes {stable_mosaic.version = 11 : i64} {
  func.func @_fused_tcn_decoder_kernel(%arg0: i32, %arg1: memref<1x32x32xf32, #tpu.memory_space<vmem>>, %arg2: memref<16x96xbf16, #tpu.memory_space<vmem>>, %arg3: memref<16x1xf32, #tpu.memory_space<vmem>>, %arg4: memref<16x48xbf16, #tpu.memory_space<vmem>>, %arg5: memref<16x1xf32, #tpu.memory_space<vmem>>, %arg6: memref<16x48xbf16, #tpu.memory_space<vmem>>, %arg7: memref<16x1xf32, #tpu.memory_space<vmem>>, %arg8: memref<8x48xbf16, #tpu.memory_space<vmem>>, %arg9: memref<8x1xf32, #tpu.memory_space<vmem>>, %arg10: memref<1x8x32xf32, #tpu.memory_space<vmem>>, %arg11: memref<96x32xbf16, #tpu.memory_space<vmem>>) attributes {dimension_semantics = [#tpu.dimension_semantics<parallel>], iteration_bounds = array<i64: 1>, scalar_prefetch = 0 : i64, scratch_operands = 1 : i64, tpu.core_type = #tpu.core_type<tc>, window_params = [{transform_indices = @transform_0, window_bounds = array<i64: 1, 32, 32>}, {pipeline_mode = #tpu.pipeline_mode<synchronous>, transform_indices = @transform_1, window_bounds = array<i64: 16, 96>}, {pipeline_mode = #tpu.pipeline_mode<synchronous>, transform_indices = @transform_2, window_bounds = array<i64: 16, 1>}, {pipeline_mode = #tpu.pipeline_mode<synchronous>, transform_indices = @transform_3, window_bounds = array<i64: 16, 48>}, {pipeline_mode = #tpu.pipeline_mode<synchronous>, transform_indices = @transform_4, window_bounds = array<i64: 16, 1>}, {pipeline_mode = #tpu.pipeline_mode<synchronous>, transform_indices = @transform_5, window_bounds = array<i64: 16, 48>}, {pipeline_mode = #tpu.pipeline_mode<synchronous>, transform_indices = @transform_6, window_bounds = array<i64: 16, 1>}, {pipeline_mode = #tpu.pipeline_mode<synchronous>, transform_indices = @transform_7, window_bounds = array<i64: 8, 48>}, {pipeline_mode = #tpu.pipeline_mode<synchronous>, transform_indices = @transform_8, window_bounds = array<i64: 8, 1>}, {transform_indices = @transform_9, window_bounds = array<i64: 1, 8, 32>}]} {
    %c0 = arith.constant 0 : index
    %c0_0 = arith.constant 0 : index
    %c0_1 = arith.constant 0 : index
    %0 = vector.load %arg1[%c0, %c0_0, %c0_1] : memref<1x32x32xf32, #tpu.memory_space<vmem>>, vector<1x32x32xf32>
    %1 = vector.shape_cast %0 : vector<1x32x32xf32> to vector<32x32xf32>
    %2 = arith.truncf %1 : vector<32x32xf32> to vector<32x32xbf16>
    %3 = vector.extract_strided_slice %2 {offsets = [0, 2], sizes = [32, 30], strides = [1, 1]} : vector<32x32xbf16> to vector<32x30xbf16>
    %c0_2 = arith.constant 0 : index
    %c0_3 = arith.constant 0 : index
    %4 = vector.load %arg11[%c0_2, %c0_3] : memref<96x32xbf16, #tpu.memory_space<vmem>>, vector<32x30xbf16>
    tpu.vector_store %arg11[%c0_2, %c0_3], %3 {strides = array<i32>} : memref<96x32xbf16, #tpu.memory_space<vmem>>, vector<32x30xbf16>,
    %cst = arith.constant 0.000000e+00 : bf16
    %5 = vector.broadcast %cst : bf16 to vector<32x2xbf16>
    %c0_4 = arith.constant 0 : index
    %c14 = arith.constant 14 : index
    %6 = vector.load %arg11[%c0_4, %c14] : memref<96x32xbf16, #tpu.memory_space<vmem>>, vector<32x2xbf16>
    tpu.vector_store %arg11[%c0_4, %c14], %5 {strides = array<i32>} : memref<96x32xbf16, #tpu.memory_space<vmem>>, vector<32x2xbf16>,
    %cst_5 = arith.constant 0.000000e+00 : bf16
    %7 = vector.broadcast %cst_5 : bf16 to vector<32x2xbf16>
    %c0_6 = arith.constant 0 : index
    %c30 = arith.constant 30 : index
    %8 = vector.load %arg11[%c0_6, %c30] : memref<96x32xbf16, #tpu.memory_space<vmem>>, vector<32x2xbf16>
    tpu.vector_store %arg11[%c0_6, %c30], %7 {strides = array<i32>} : memref<96x32xbf16, #tpu.memory_space<vmem>>, vector<32x2xbf16>,
    %c32 = arith.constant 32 : index
    %c0_7 = arith.constant 0 : index
    %9 = vector.load %arg11[%c32, %c0_7] : memref<96x32xbf16, #tpu.memory_space<vmem>>, vector<32x32xbf16>
    tpu.vector_store %arg11[%c32, %c0_7], %2 {strides = array<i32>} : memref<96x32xbf16, #tpu.memory_space<vmem>>, vector<32x32xbf16>,
    %10 = vector.extract_strided_slice %2 {offsets = [0, 0], sizes = [32, 30], strides = [1, 1]} : vector<32x32xbf16> to vector<32x30xbf16>
    %c64 = arith.constant 64 : index
    %c2 = arith.constant 2 : index
    %11 = vector.load %arg11[%c64, %c2] : memref<96x32xbf16, #tpu.memory_space<vmem>>, vector<32x30xbf16>
    tpu.vector_store %arg11[%c64, %c2], %10 {strides = array<i32>} : memref<96x32xbf16, #tpu.memory_space<vmem>>, vector<32x30xbf16>,
    %cst_8 = arith.constant 0.000000e+00 : bf16
    %12 = vector.broadcast %cst_8 : bf16 to vector<32x2xbf16>
    %c64_9 = arith.constant 64 : index
    %c0_10 = arith.constant 0 : index
    %13 = vector.load %arg11[%c64_9, %c0_10] : memref<96x32xbf16, #tpu.memory_space<vmem>>, vector<32x2xbf16>
    tpu.vector_store %arg11[%c64_9, %c0_10], %12 {strides = array<i32>} : memref<96x32xbf16, #tpu.memory_space<vmem>>, vector<32x2xbf16>,
    %cst_11 = arith.constant 0.000000e+00 : bf16
    %14 = vector.broadcast %cst_11 : bf16 to vector<32x2xbf16>
    %c64_12 = arith.constant 64 : index
    %c16 = arith.constant 16 : index
    %15 = vector.load %arg11[%c64_12, %c16] : memref<96x32xbf16, #tpu.memory_space<vmem>>, vector<32x2xbf16>
    tpu.vector_store %arg11[%c64_12, %c16], %14 {strides = array<i32>} : memref<96x32xbf16, #tpu.memory_space<vmem>>, vector<32x2xbf16>,
    %c0_13 = arith.constant 0 : index
    %c0_14 = arith.constant 0 : index
    %16 = vector.load %arg2[%c0_13, %c0_14] : memref<16x96xbf16, #tpu.memory_space<vmem>>, vector<16x96xbf16>
    %c0_15 = arith.constant 0 : index
    %c0_16 = arith.constant 0 : index
    %17 = vector.load %arg3[%c0_15, %c0_16] : memref<16x1xf32, #tpu.memory_space<vmem>>, vector<16x1xf32>
    %c0_17 = arith.constant 0 : index
    %c0_18 = arith.constant 0 : index
    %18 = vector.load %arg11[%c0_17, %c0_18] : memref<96x32xbf16, #tpu.memory_space<vmem>>, vector<96x32xbf16>
    %cst_19 = arith.constant dense<0.000000e+00> : vector<16x32xf32>
    %19 = tpu.matmul %16, %18, %cst_19 {dimension_numbers = #tpu.dot_dimension_numbers<[1], [0], [0], [1], [0, 0, 1, 1], [], []>} : vector<16x96xbf16>, vector<96x32xbf16>, vector<16x32xf32> -> vector<16x32xf32>
    %20 = vector.broadcast %17 : vector<16x1xf32> to vector<16x32xf32>
    %21 = arith.addf %19, %20 : vector<16x32xf32>
    %cst_20 = arith.constant 0.000000e+00 : f32
    %22 = vector.broadcast %cst_20 : f32 to vector<16x32xf32>
    %23 = arith.maximumf %21, %22 : vector<16x32xf32>
    %24 = arith.truncf %23 : vector<16x32xf32> to vector<16x32xbf16>
    %25 = vector.extract_strided_slice %24 {offsets = [0, 2], sizes = [16, 30], strides = [1, 1]} : vector<16x32xbf16> to vector<16x30xbf16>
    %c0_21 = arith.constant 0 : index
    %c0_22 = arith.constant 0 : index
    %26 = vector.load %arg11[%c0_21, %c0_22] : memref<96x32xbf16, #tpu.memory_space<vmem>>, vector<16x30xbf16>
    tpu.vector_store %arg11[%c0_21, %c0_22], %25 {strides = array<i32>} : memref<96x32xbf16, #tpu.memory_space<vmem>>, vector<16x30xbf16>,
    %cst_23 = arith.constant 0.000000e+00 : bf16
    %27 = vector.broadcast %cst_23 : bf16 to vector<16x2xbf16>
    %c0_24 = arith.constant 0 : index
    %c14_25 = arith.constant 14 : index
    %28 = vector.load %arg11[%c0_24, %c14_25] : memref<96x32xbf16, #tpu.memory_space<vmem>>, vector<16x2xbf16>
    tpu.vector_store %arg11[%c0_24, %c14_25], %27 {strides = array<i32>} : memref<96x32xbf16, #tpu.memory_space<vmem>>, vector<16x2xbf16>,
    %cst_26 = arith.constant 0.000000e+00 : bf16
    %29 = vector.broadcast %cst_26 : bf16 to vector<16x2xbf16>
    %c0_27 = arith.constant 0 : index
    %c30_28 = arith.constant 30 : index
    %30 = vector.load %arg11[%c0_27, %c30_28] : memref<96x32xbf16, #tpu.memory_space<vmem>>, vector<16x2xbf16>
    tpu.vector_store %arg11[%c0_27, %c30_28], %29 {strides = array<i32>} : memref<96x32xbf16, #tpu.memory_space<vmem>>, vector<16x2xbf16>,
    %c16_29 = arith.constant 16 : index
    %c0_30 = arith.constant 0 : index
    %31 = vector.load %arg11[%c16_29, %c0_30] : memref<96x32xbf16, #tpu.memory_space<vmem>>, vector<16x32xbf16>
    tpu.vector_store %arg11[%c16_29, %c0_30], %24 {strides = array<i32>} : memref<96x32xbf16, #tpu.memory_space<vmem>>, vector<16x32xbf16>,
    %32 = vector.extract_strided_slice %24 {offsets = [0, 0], sizes = [16, 30], strides = [1, 1]} : vector<16x32xbf16> to vector<16x30xbf16>
    %c32_31 = arith.constant 32 : index
    %c2_32 = arith.constant 2 : index
    %33 = vector.load %arg11[%c32_31, %c2_32] : memref<96x32xbf16, #tpu.memory_space<vmem>>, vector<16x30xbf16>
    tpu.vector_store %arg11[%c32_31, %c2_32], %32 {strides = array<i32>} : memref<96x32xbf16, #tpu.memory_space<vmem>>, vector<16x30xbf16>,
    %cst_33 = arith.constant 0.000000e+00 : bf16
    %34 = vector.broadcast %cst_33 : bf16 to vector<16x2xbf16>
    %c32_34 = arith.constant 32 : index
    %c0_35 = arith.constant 0 : index
    %35 = vector.load %arg11[%c32_34, %c0_35] : memref<96x32xbf16, #tpu.memory_space<vmem>>, vector<16x2xbf16>
    tpu.vector_store %arg11[%c32_34, %c0_35], %34 {strides = array<i32>} : memref<96x32xbf16, #tpu.memory_space<vmem>>, vector<16x2xbf16>,
    %cst_36 = arith.constant 0.000000e+00 : bf16
    %36 = vector.broadcast %cst_36 : bf16 to vector<16x2xbf16>
    %c32_37 = arith.constant 32 : index
    %c16_38 = arith.constant 16 : index
    %37 = vector.load %arg11[%c32_37, %c16_38] : memref<96x32xbf16, #tpu.memory_space<vmem>>, vector<16x2xbf16>
    tpu.vector_store %arg11[%c32_37, %c16_38], %36 {strides = array<i32>} : memref<96x32xbf16, #tpu.memory_space<vmem>>, vector<16x2xbf16>,
    %c0_39 = arith.constant 0 : index
    %c0_40 = arith.constant 0 : index
    %38 = vector.load %arg4[%c0_39, %c0_40] : memref<16x48xbf16, #tpu.memory_space<vmem>>, vector<16x48xbf16>
    %c0_41 = arith.constant 0 : index
    %c0_42 = arith.constant 0 : index
    %39 = vector.load %arg5[%c0_41, %c0_42] : memref<16x1xf32, #tpu.memory_space<vmem>>, vector<16x1xf32>
    %c0_43 = arith.constant 0 : index
    %c0_44 = arith.constant 0 : index
    %40 = vector.load %arg11[%c0_43, %c0_44] : memref<96x32xbf16, #tpu.memory_space<vmem>>, vector<48x32xbf16>
    %cst_45 = arith.constant dense<0.000000e+00> : vector<16x32xf32>
    %41 = tpu.matmul %38, %40, %cst_45 {dimension_numbers = #tpu.dot_dimension_numbers<[1], [0], [0], [1], [0, 0, 1, 1], [], []>} : vector<16x48xbf16>, vector<48x32xbf16>, vector<16x32xf32> -> vector<16x32xf32>
    %42 = vector.broadcast %39 : vector<16x1xf32> to vector<16x32xf32>
    %43 = arith.addf %41, %42 : vector<16x32xf32>
    %cst_46 = arith.constant 0.000000e+00 : f32
    %44 = vector.broadcast %cst_46 : f32 to vector<16x32xf32>
    %45 = arith.maximumf %43, %44 : vector<16x32xf32>
    %46 = arith.truncf %45 : vector<16x32xf32> to vector<16x32xbf16>
    %47 = vector.extract_strided_slice %46 {offsets = [0, 1], sizes = [16, 31], strides = [1, 1]} : vector<16x32xbf16> to vector<16x31xbf16>
    %c0_47 = arith.constant 0 : index
    %c0_48 = arith.constant 0 : index
    %48 = vector.load %arg11[%c0_47, %c0_48] : memref<96x32xbf16, #tpu.memory_space<vmem>>, vector<16x31xbf16>
    tpu.vector_store %arg11[%c0_47, %c0_48], %47 {strides = array<i32>} : memref<96x32xbf16, #tpu.memory_space<vmem>>, vector<16x31xbf16>,
    %cst_49 = arith.constant 0.000000e+00 : bf16
    %49 = vector.broadcast %cst_49 : bf16 to vector<16x1xbf16>
    %c0_50 = arith.constant 0 : index
    %c15 = arith.constant 15 : index
    %50 = vector.load %arg11[%c0_50, %c15] : memref<96x32xbf16, #tpu.memory_space<vmem>>, vector<16x1xbf16>
    tpu.vector_store %arg11[%c0_50, %c15], %49 {strides = array<i32>} : memref<96x32xbf16, #tpu.memory_space<vmem>>, vector<16x1xbf16>,
    %cst_51 = arith.constant 0.000000e+00 : bf16
    %51 = vector.broadcast %cst_51 : bf16 to vector<16x1xbf16>
    %c0_52 = arith.constant 0 : index
    %c31 = arith.constant 31 : index
    %52 = vector.load %arg11[%c0_52, %c31] : memref<96x32xbf16, #tpu.memory_space<vmem>>, vector<16x1xbf16>
    tpu.vector_store %arg11[%c0_52, %c31], %51 {strides = array<i32>} : memref<96x32xbf16, #tpu.memory_space<vmem>>, vector<16x1xbf16>,
    %c16_53 = arith.constant 16 : index
    %c0_54 = arith.constant 0 : index
    %53 = vector.load %arg11[%c16_53, %c0_54] : memref<96x32xbf16, #tpu.memory_space<vmem>>, vector<16x32xbf16>
    tpu.vector_store %arg11[%c16_53, %c0_54], %46 {strides = array<i32>} : memref<96x32xbf16, #tpu.memory_space<vmem>>, vector<16x32xbf16>,
    %54 = vector.extract_strided_slice %46 {offsets = [0, 0], sizes = [16, 31], strides = [1, 1]} : vector<16x32xbf16> to vector<16x31xbf16>
    %c32_55 = arith.constant 32 : index
    %c1 = arith.constant 1 : index
    %55 = vector.load %arg11[%c32_55, %c1] : memref<96x32xbf16, #tpu.memory_space<vmem>>, vector<16x31xbf16>
    tpu.vector_store %arg11[%c32_55, %c1], %54 {strides = array<i32>} : memref<96x32xbf16, #tpu.memory_space<vmem>>, vector<16x31xbf16>,
    %cst_56 = arith.constant 0.000000e+00 : bf16
    %56 = vector.broadcast %cst_56 : bf16 to vector<16x1xbf16>
    %c32_57 = arith.constant 32 : index
    %c0_58 = arith.constant 0 : index
    %57 = vector.load %arg11[%c32_57, %c0_58] : memref<96x32xbf16, #tpu.memory_space<vmem>>, vector<16x1xbf16>
    tpu.vector_store %arg11[%c32_57, %c0_58], %56 {strides = array<i32>} : memref<96x32xbf16, #tpu.memory_space<vmem>>, vector<16x1xbf16>,
    %cst_59 = arith.constant 0.000000e+00 : bf16
    %58 = vector.broadcast %cst_59 : bf16 to vector<16x1xbf16>
    %c32_60 = arith.constant 32 : index
    %c16_61 = arith.constant 16 : index
    %59 = vector.load %arg11[%c32_60, %c16_61] : memref<96x32xbf16, #tpu.memory_space<vmem>>, vector<16x1xbf16>
    tpu.vector_store %arg11[%c32_60, %c16_61], %58 {strides = array<i32>} : memref<96x32xbf16, #tpu.memory_space<vmem>>, vector<16x1xbf16>,
    %c0_62 = arith.constant 0 : index
    %c0_63 = arith.constant 0 : index
    %60 = vector.load %arg6[%c0_62, %c0_63] : memref<16x48xbf16, #tpu.memory_space<vmem>>, vector<16x48xbf16>
    %c0_64 = arith.constant 0 : index
    %c0_65 = arith.constant 0 : index
    %61 = vector.load %arg7[%c0_64, %c0_65] : memref<16x1xf32, #tpu.memory_space<vmem>>, vector<16x1xf32>
    %c0_66 = arith.constant 0 : index
    %c0_67 = arith.constant 0 : index
    %62 = vector.load %arg11[%c0_66, %c0_67] : memref<96x32xbf16, #tpu.memory_space<vmem>>, vector<48x32xbf16>
    %cst_68 = arith.constant dense<0.000000e+00> : vector<16x32xf32>
    %63 = tpu.matmul %60, %62, %cst_68 {dimension_numbers = #tpu.dot_dimension_numbers<[1], [0], [0], [1], [0, 0, 1, 1], [], []>} : vector<16x48xbf16>, vector<48x32xbf16>, vector<16x32xf32> -> vector<16x32xf32>
    %64 = vector.broadcast %61 : vector<16x1xf32> to vector<16x32xf32>
    %65 = arith.addf %63, %64 : vector<16x32xf32>
    %cst_69 = arith.constant 0.000000e+00 : f32
    %66 = vector.broadcast %cst_69 : f32 to vector<16x32xf32>
    %67 = arith.maximumf %65, %66 : vector<16x32xf32>
    %68 = arith.truncf %67 : vector<16x32xf32> to vector<16x32xbf16>
    %69 = vector.extract_strided_slice %68 {offsets = [0, 1], sizes = [16, 31], strides = [1, 1]} : vector<16x32xbf16> to vector<16x31xbf16>
    %c0_70 = arith.constant 0 : index
    %c0_71 = arith.constant 0 : index
    %70 = vector.load %arg11[%c0_70, %c0_71] : memref<96x32xbf16, #tpu.memory_space<vmem>>, vector<16x31xbf16>
    tpu.vector_store %arg11[%c0_70, %c0_71], %69 {strides = array<i32>} : memref<96x32xbf16, #tpu.memory_space<vmem>>, vector<16x31xbf16>,
    %cst_72 = arith.constant 0.000000e+00 : bf16
    %71 = vector.broadcast %cst_72 : bf16 to vector<16x1xbf16>
    %c0_73 = arith.constant 0 : index
    %c15_74 = arith.constant 15 : index
    %72 = vector.load %arg11[%c0_73, %c15_74] : memref<96x32xbf16, #tpu.memory_space<vmem>>, vector<16x1xbf16>
    tpu.vector_store %arg11[%c0_73, %c15_74], %71 {strides = array<i32>} : memref<96x32xbf16, #tpu.memory_space<vmem>>, vector<16x1xbf16>,
    %cst_75 = arith.constant 0.000000e+00 : bf16
    %73 = vector.broadcast %cst_75 : bf16 to vector<16x1xbf16>
    %c0_76 = arith.constant 0 : index
    %c31_77 = arith.constant 31 : index
    %74 = vector.load %arg11[%c0_76, %c31_77] : memref<96x32xbf16, #tpu.memory_space<vmem>>, vector<16x1xbf16>
    tpu.vector_store %arg11[%c0_76, %c31_77], %73 {strides = array<i32>} : memref<96x32xbf16, #tpu.memory_space<vmem>>, vector<16x1xbf16>,
    %c16_78 = arith.constant 16 : index
    %c0_79 = arith.constant 0 : index
    %75 = vector.load %arg11[%c16_78, %c0_79] : memref<96x32xbf16, #tpu.memory_space<vmem>>, vector<16x32xbf16>
    tpu.vector_store %arg11[%c16_78, %c0_79], %68 {strides = array<i32>} : memref<96x32xbf16, #tpu.memory_space<vmem>>, vector<16x32xbf16>,
    %76 = vector.extract_strided_slice %68 {offsets = [0, 0], sizes = [16, 31], strides = [1, 1]} : vector<16x32xbf16> to vector<16x31xbf16>
    %c32_80 = arith.constant 32 : index
    %c1_81 = arith.constant 1 : index
    %77 = vector.load %arg11[%c32_80, %c1_81] : memref<96x32xbf16, #tpu.memory_space<vmem>>, vector<16x31xbf16>
    tpu.vector_store %arg11[%c32_80, %c1_81], %76 {strides = array<i32>} : memref<96x32xbf16, #tpu.memory_space<vmem>>, vector<16x31xbf16>,
    %cst_82 = arith.constant 0.000000e+00 : bf16
    %78 = vector.broadcast %cst_82 : bf16 to vector<16x1xbf16>
    %c32_83 = arith.constant 32 : index
    %c0_84 = arith.constant 0 : index
    %79 = vector.load %arg11[%c32_83, %c0_84] : memref<96x32xbf16, #tpu.memory_space<vmem>>, vector<16x1xbf16>
    tpu.vector_store %arg11[%c32_83, %c0_84], %78 {strides = array<i32>} : memref<96x32xbf16, #tpu.memory_space<vmem>>, vector<16x1xbf16>,
    %cst_85 = arith.constant 0.000000e+00 : bf16
    %80 = vector.broadcast %cst_85 : bf16 to vector<16x1xbf16>
    %c32_86 = arith.constant 32 : index
    %c16_87 = arith.constant 16 : index
    %81 = vector.load %arg11[%c32_86, %c16_87] : memref<96x32xbf16, #tpu.memory_space<vmem>>, vector<16x1xbf16>
    tpu.vector_store %arg11[%c32_86, %c16_87], %80 {strides = array<i32>} : memref<96x32xbf16, #tpu.memory_space<vmem>>, vector<16x1xbf16>,
    %c0_88 = arith.constant 0 : index
    %c0_89 = arith.constant 0 : index
    %82 = vector.load %arg8[%c0_88, %c0_89] : memref<8x48xbf16, #tpu.memory_space<vmem>>, vector<8x48xbf16>
    %c0_90 = arith.constant 0 : index
    %c0_91 = arith.constant 0 : index
    %83 = vector.load %arg9[%c0_90, %c0_91] : memref<8x1xf32, #tpu.memory_space<vmem>>, vector<8x1xf32>
    %c0_92 = arith.constant 0 : index
    %c0_93 = arith.constant 0 : index
    %84 = vector.load %arg11[%c0_92, %c0_93] : memref<96x32xbf16, #tpu.memory_space<vmem>>, vector<48x32xbf16>
    %cst_94 = arith.constant dense<0.000000e+00> : vector<8x32xf32>
    %85 = tpu.matmul %82, %84, %cst_94 {dimension_numbers = #tpu.dot_dimension_numbers<[1], [0], [0], [1], [0, 0, 1, 1], [], []>} : vector<8x48xbf16>, vector<48x32xbf16>, vector<8x32xf32> -> vector<8x32xf32>
    %86 = vector.broadcast %83 : vector<8x1xf32> to vector<8x32xf32>
    %87 = arith.addf %85, %86 : vector<8x32xf32>
    %c0_95 = arith.constant 0 : index
    %c0_96 = arith.constant 0 : index
    %c0_97 = arith.constant 0 : index
    %88 = vector.load %arg10[%c0_95, %c0_96, %c0_97] : memref<1x8x32xf32, #tpu.memory_space<vmem>>, vector<1x8x32xf32>
    %89 = vector.shape_cast %88 : vector<1x8x32xf32> to vector<8x32xf32>
    %90 = vector.shape_cast %87 : vector<8x32xf32> to vector<1x8x32xf32>
    tpu.vector_store %arg10[%c0_95, %c0_96, %c0_97], %90 {strides = array<i32>} : memref<1x8x32xf32, #tpu.memory_space<vmem>>, vector<1x8x32xf32>,
    return
  }
  func.func @transform_0(%arg0: i32) -> (i32, i32, i32) {
    %c0_i32 = arith.constant 0 : i32
    %c0_i32_0 = arith.constant 0 : i32
    %c0_i32_1 = arith.constant 0 : i32
    return %arg0, %c0_i32, %c0_i32_0 : i32, i32, i32
  }
  func.func @transform_1(%arg0: i32) -> (i32, i32) {
    %c0_i32 = arith.constant 0 : i32
    %c0_i32_0 = arith.constant 0 : i32
    %c0_i32_1 = arith.constant 0 : i32
    return %c0_i32, %c0_i32_0 : i32, i32
  }
  func.func @transform_2(%arg0: i32) -> (i32, i32) {
    %c0_i32 = arith.constant 0 : i32
    %c0_i32_0 = arith.constant 0 : i32
    %c0_i32_1 = arith.constant 0 : i32
    return %c0_i32, %c0_i32_0 : i32, i32
  }
  func.func @transform_3(%arg0: i32) -> (i32, i32) {
    %c0_i32 = arith.constant 0 : i32
    %c0_i32_0 = arith.constant 0 : i32
    %c0_i32_1 = arith.constant 0 : i32
    return %c0_i32, %c0_i32_0 : i32, i32
  }
  func.func @transform_4(%arg0: i32) -> (i32, i32) {
    %c0_i32 = arith.constant 0 : i32
    %c0_i32_0 = arith.constant 0 : i32
    %c0_i32_1 = arith.constant 0 : i32
    return %c0_i32, %c0_i32_0 : i32, i32
  }
  func.func @transform_5(%arg0: i32) -> (i32, i32) {
    %c0_i32 = arith.constant 0 : i32
    %c0_i32_0 = arith.constant 0 : i32
    %c0_i32_1 = arith.constant 0 : i32
    return %c0_i32, %c0_i32_0 : i32, i32
  }
  func.func @transform_6(%arg0: i32) -> (i32, i32) {
    %c0_i32 = arith.constant 0 : i32
    %c0_i32_0 = arith.constant 0 : i32
    %c0_i32_1 = arith.constant 0 : i32
    return %c0_i32, %c0_i32_0 : i32, i32
  }
  func.func @transform_7(%arg0: i32) -> (i32, i32) {
    %c0_i32 = arith.constant 0 : i32
    %c0_i32_0 = arith.constant 0 : i32
    %c0_i32_1 = arith.constant 0 : i32
    return %c0_i32, %c0_i32_0 : i32, i32
  }
  func.func @transform_8(%arg0: i32) -> (i32, i32) {
    %c0_i32 = arith.constant 0 : i32
    %c0_i32_0 = arith.constant 0 : i32
    %c0_i32_1 = arith.constant 0 : i32
    return %c0_i32, %c0_i32_0 : i32, i32
  }
  func.func @transform_9(%arg0: i32) -> (i32, i32, i32) {
    %c0_i32 = arith.constant 0 : i32
    %c0_i32_0 = arith.constant 0 : i32
    %c0_i32_1 = arith.constant 0 : i32
    return %arg0, %c0_i32, %c0_i32_0 : i32, i32, i32
  }
}

</mosaic_0001>

<llo_original>
// kernel: tpu_custom_call.1
$region0: #{tpu_custom_call.1}
  #allocation0 [shape = 'u32[]', space=smem, size = 0x4, offset = 0x4, fixed_abs, tag = 'smem constant byte address 0x4 - core index']
  #allocation1 [shape = 'u32[72,128]{1,0:T(1,128)}', space=vmem, size = 0x9000, scoped, tag = 'internal scratch']
  #allocation2 [shape = 'bf16[96,32]{1,0:T(8,128)(2,1)}', space=vmem, size = 0x6000, scoped, tag = 'scratch operand']
  %s0 = inlined_call_operand.vmem [shape: f32[1,32,32], index: 0, kind: input, shape index: {}]
  %s1 = inlined_call_operand.vmem [shape: bf16[16,96], index: 1, kind: input, shape index: {}]
  %s2 = inlined_call_operand.vmem [shape: f32[16,1], index: 2, kind: input, shape index: {}]
  %s3 = inlined_call_operand.vmem [shape: bf16[16,48], index: 3, kind: input, shape index: {}]
  %s4 = inlined_call_operand.vmem [shape: f32[16,1], index: 4, kind: input, shape index: {}]
  %s5 = inlined_call_operand.vmem [shape: bf16[16,48], index: 5, kind: input, shape index: {}]
  %s6 = inlined_call_operand.vmem [shape: f32[16,1], index: 6, kind: input, shape index: {}]
  %s7 = inlined_call_operand.vmem [shape: bf16[8,48], index: 7, kind: input, shape index: {}]
  %s8 = inlined_call_operand.vmem [shape: f32[8,1], index: 8, kind: input, shape index: {}]
  %s9 = inlined_call_operand.hbm [shape: f32[1,8,32], index: 9, kind: output, shape index: {}]
  %s10 = sld [smem:[#allocation0]]
  $region46: #{tpu_custom_call.1} parent=0
    _
  %s12 = ssub.s32 1, %s10
  %s13 = scalar_select 0, %s12, %s10
  $region1: #{tpu_custom_call.1} parent=0
    #allocation3 [shape = 'u8[4096]{0}', space=vmem, size = 0x1000, scoped, tag = 'output window, operand 0, single buffered']
    #allocation4 [shape = 's32[1]{0}', space=sflag, size = 0x4, scoped, tag = 'scoped memory for tpu_custom_call.1']
    %14 = vsyncpa [#allocation4], 0
    // Predicated region
    $region2: #{tpu_custom_call.1} parent=1 // pred_check
      _
    $region3: #{tpu_custom_call.1} parent=1 // pred_check_branch
      %16 = sbr.rel (0) target = $region5
    $region4: #{tpu_custom_call.1} parent=1 // pred_region
      _
    $region5: #{tpu_custom_call.1} parent=1 // pred_fallthru
      _
    // Predicated region
    $region6: #{tpu_custom_call.1} parent=1 // pred_check
      _
    $region7: #{tpu_custom_call.1} parent=1 // pred_check_branch
      %18 = sbr.rel (0) target = $region9
    $region8: #{tpu_custom_call.1} parent=1 // pred_region
      _
    $region9: #{tpu_custom_call.1} parent=1 // pred_fallthru
      _
    // Predicated region
    $region10: #{tpu_custom_call.1} parent=1 // pred_check
      _
    $region11: #{tpu_custom_call.1} parent=1 // pred_check_branch
      %20 = sbr.rel (0) target = $region13
    $region12: #{tpu_custom_call.1} parent=1 // pred_region
      _
    $region13: #{tpu_custom_call.1} parent=1 // pred_fallthru
      _
    // Predicated region
    $region14: #{tpu_custom_call.1} parent=1 // pred_check
      _
    $region15: #{tpu_custom_call.1} parent=1 // pred_check_branch
      %22 = sbr.rel (0) target = $region17
    $region16: #{tpu_custom_call.1} parent=1 // pred_region
      _
    $region17: #{tpu_custom_call.1} parent=1 // pred_fallthru
      _
    // Predicated region
    $region18: #{tpu_custom_call.1} parent=1 // pred_check
      _
    $region19: #{tpu_custom_call.1} parent=1 // pred_check_branch
      %24 = sbr.rel (0) target = $region21
    $region20: #{tpu_custom_call.1} parent=1 // pred_region
      _
    $region21: #{tpu_custom_call.1} parent=1 // pred_fallthru
      _
    // Predicated region
    $region22: #{tpu_custom_call.1} parent=1 // pred_check
      _
    $region23: #{tpu_custom_call.1} parent=1 // pred_check_branch
      %26 = sbr.rel (0) target = $region25
    $region24: #{tpu_custom_call.1} parent=1 // pred_region
      _
    $region25: #{tpu_custom_call.1} parent=1 // pred_fallthru
      _
    // Predicated region
    $region26: #{tpu_custom_call.1} parent=1 // pred_check
      _
    $region27: #{tpu_custom_call.1} parent=1 // pred_check_branch
      %28 = sbr.rel (0) target = $region29
    $region28: #{tpu_custom_call.1} parent=1 // pred_region
      _
    $region29: #{tpu_custom_call.1} parent=1 // pred_fallthru
      _
    // Predicated region
    $region30: #{tpu_custom_call.1} parent=1 // pred_check
      _
    $region31: #{tpu_custom_call.1} parent=1 // pred_check_branch
      %30 = sbr.rel (0) target = $region33
    $region32: #{tpu_custom_call.1} parent=1 // pred_region
      _
    $region33: #{tpu_custom_call.1} parent=1 // pred_fallthru
      _
    // Predicated region
    $region34: #{tpu_custom_call.1} parent=1 // pred_check
      _
    $region35: #{tpu_custom_call.1} parent=1 // pred_check_branch
      %32 = sbr.rel (0) target = $region37
    $region36: #{tpu_custom_call.1} parent=1 // pred_region
      _
    $region37: #{tpu_custom_call.1} parent=1 // pred_fallthru
      _
    %v34 = vld [vmem:[%s0] sm:$0xff]
    %v35 = vld [vmem:[%s0 + $0x8] sm:$0xff]
    %v36 = vld [vmem:[%s0 + $0x10] sm:$0xff]
    %v37 = vld [vmem:[%s0 + $0x18] sm:$0xff]
    %v38 = vpack.c.bf16 %v34, %v34
    %v39 = vpack.c.bf16 %v35, %v35
    %v40 = vpack.c.bf16 %v36, %v36
    %v41 = vpack.c.bf16 %v37, %v37
    %46 = vrot.lane.b32.xlu0 %v38, 126
    %v47 = vpop.permute.xlu0 %46
    %48 = vrot.lane.b32.xlu0 %v39, 126
    %v49 = vpop.permute.xlu0 %48
    %50 = vrot.lane.b32.xlu0 %v40, 126
    %v51 = vpop.permute.xlu0 %50
    %52 = vrot.lane.b32.xlu0 %v41, 126
    %v53 = vpop.permute.xlu0 %52
    %vm58 = vcmask 240640
    %59 = vst.msk [vmem:[#allocation2] sm:$0xf] %vm58, %v47
    %60 = vst.msk [vmem:[#allocation2 + $0x4] sm:$0xf] %vm58, %v49
    %61 = vst.msk [vmem:[#allocation2 + $0x8] sm:$0xf] %vm58, %v51
    %62 = vst.msk [vmem:[#allocation2 + $0xc] sm:$0xf] %vm58, %v53
    %vm63 = vcmask 126064
    %64 = vst.msk [vmem:[#allocation2] sm:$0xf] %vm63, 0
    %65 = vst.msk [vmem:[#allocation2 + $0x4] sm:$0xf] %vm63, 0
    %66 = vst.msk [vmem:[#allocation2 + $0x8] sm:$0xf] %vm63, 0
    %67 = vst.msk [vmem:[#allocation2 + $0xc] sm:$0xf] %vm63, 0
    %vm68 = vcmask 257264
    %69 = vst.msk [vmem:[#allocation2] sm:$0xf] %vm68, 0
    %70 = vst.msk [vmem:[#allocation2 + $0x4] sm:$0xf] %vm68, 0
    %71 = vst.msk [vmem:[#allocation2 + $0x8] sm:$0xf] %vm68, 0
    %72 = vst.msk [vmem:[#allocation2 + $0xc] sm:$0xf] %vm68, 0
    %vm73 = vcmask 257024
    %74 = vst.msk [vmem:[#allocation2 + $0x10] sm:$0xf] %vm73, %v38
    %75 = vst.msk [vmem:[#allocation2 + $0x14] sm:$0xf] %vm73, %v39
    %76 = vst.msk [vmem:[#allocation2 + $0x18] sm:$0xf] %vm73, %v40
    %77 = vst.msk [vmem:[#allocation2 + $0x1c] sm:$0xf] %vm73, %v41
    %78 = vrot.lane.b32.xlu0 %v38, 2
    %v79 = vpop.permute.xlu0 %78
    %80 = vrot.lane.b32.xlu0 %v39, 2
    %v81 = vpop.permute.xlu0 %80
    %82 = vrot.lane.b32.xlu0 %v40, 2
    %v83 = vpop.permute.xlu0 %82
    %84 = vrot.lane.b32.xlu0 %v41, 2
    %v85 = vpop.permute.xlu0 %84
    %vm90 = vcmask 257040
    %91 = vst.msk [vmem:[#allocation2 + $0x20] sm:$0xf] %vm90, %v79
    %92 = vst.msk [vmem:[#allocation2 + $0x24] sm:$0xf] %vm90, %v81
    %93 = vst.msk [vmem:[#allocation2 + $0x28] sm:$0xf] %vm90, %v83
    %94 = vst.msk [vmem:[#allocation2 + $0x2c] sm:$0xf] %vm90, %v85
    %vm95 = vcmask 11264
    %96 = vst.msk [vmem:[#allocation2 + $0x20] sm:$0xf] %vm95, 0
    %97 = vst.msk [vmem:[#allocation2 + $0x24] sm:$0xf] %vm95, 0
    %98 = vst.msk [vmem:[#allocation2 + $0x28] sm:$0xf] %vm95, 0
    %99 = vst.msk [vmem:[#allocation2 + $0x2c] sm:$0xf] %vm95, 0
    %vm100 = vcmask 142464
    %101 = vst.msk [vmem:[#allocation2 + $0x20] sm:$0xf] %vm100, 0
    %102 = vst.msk [vmem:[#allocation2 + $0x24] sm:$0xf] %vm100, 0
    %103 = vst.msk [vmem:[#allocation2 + $0x28] sm:$0xf] %vm100, 0
    %104 = vst.msk [vmem:[#allocation2 + $0x2c] sm:$0xf] %vm100, 0
    %v105 = vld [vmem:[%s1] sm:$0xf]
    %v106 = vld [vmem:[%s1 + $0x4] sm:$0xf]
    %v107 = vld [vmem:[%s2] sm:$0xff]
    %v108 = vld [vmem:[%s2 + $0x8] sm:$0xff]
    %v109 = vld [vmem:[#allocation2] sm:$0xf]
    %v110 = vld [vmem:[#allocation2 + $0x4] sm:$0xf]
    %v111 = vld [vmem:[#allocation2 + $0x8] sm:$0xf]
    %v112 = vld [vmem:[#allocation2 + $0xc] sm:$0xf]
    %v113 = vld [vmem:[#allocation2 + $0x10] sm:$0xf]
    %v114 = vld [vmem:[#allocation2 + $0x14] sm:$0xf]
    %v115 = vld [vmem:[#allocation2 + $0x18] sm:$0xf]
    %v116 = vld [vmem:[#allocation2 + $0x1c] sm:$0xf]
    %v117 = vld [vmem:[#allocation2 + $0x20] sm:$0xf]
    %v118 = vld [vmem:[#allocation2 + $0x24] sm:$0xf]
    %v119 = vld [vmem:[#allocation2 + $0x28] sm:$0xf]
    %v120 = vld [vmem:[#allocation2 + $0x2c] sm:$0xf]
    %122 = vset.pattern.permute.xlu0 0
    %123 = vperm.xlu0 %122, %v107
    %v124 = vpop.permute.xlu0 %123
    %127 = vset.pattern.permute.xlu0 0
    %128 = vperm.xlu0 %127, %v108
    %v129 = vpop.permute.xlu0 %128
    %v133 = vunpack.c.l.b16 %v105
    %v134 = vunpack.c.l.b16 %v106
    %v135 = vpack.c.b16 %v134, %v133
    %v148 = vunpack.c.l.b16 %v109
    %v149 = vunpack.c.l.b16 %v110
    %v150 = vunpack.c.l.b16 %v111
    %v151 = vunpack.c.l.b16 %v112
    %v152 = vunpack.c.l.b16 %v113
    %v153 = vunpack.c.l.b16 %v114
    %v154 = vunpack.c.l.b16 %v115
    %v155 = vunpack.c.l.b16 %v116
    %v156 = vunpack.c.l.b16 %v117
    %v157 = vunpack.c.l.b16 %v118
    %v158 = vunpack.c.l.b16 %v119
    %v159 = vunpack.c.l.b16 %v120
    %v160 = vpack.c.b16 %v149, %v148
    %v161 = vpack.c.b16 %v151, %v150
    %v162 = vpack.c.b16 %v153, %v152
    %v163 = vpack.c.b16 %v155, %v154
    %v164 = vpack.c.b16 %v157, %v156
    %v165 = vpack.c.b16 %v159, %v158
    %vm172 = vcmask 785408
    %v174 = vsel %vm172, %v135, 0
    %176 = vmatpush.bf16.msra.mxu0 0
    %177 = vmatpush.bf16.msra.mxu0 0
    %178 = vmatpush.bf16.msra.mxu0 %v165
    %179 = vmatpush.bf16.msra.mxu0 %v164
    %180 = vmatpush.bf16.msra.mxu0 %v163
    %181 = vmatpush.bf16.msra.mxu0 %v162
    %182 = vmatpush.bf16.msra.mxu0 %v161
    %183 = vmatpush.bf16.msra.mxu0 %v160
    %184 = vmatmul.bf16.gmra.mxu0 %v174
    %v185 = vpop.f32.mrf.mxu0
    %v186 = vadd.f32 %v124, %v185
    %v187 = vpop.f32.mrf.mxu0
    %v188 = vadd.f32 %v129, %v187
    %189 = vdwg.mxu0
    %v190 = vmax.f32 %v186, 0.0
    %v191 = vmax.f32 %v188, 0.0
    %v192 = vpack.c.bf16 %v190, %v190
    %v193 = vpack.c.bf16 %v191, %v191
    %196 = vrot.lane.b32.xlu0 %v192, 126
    %v197 = vpop.permute.xlu0 %196
    %198 = vrot.lane.b32.xlu0 %v193, 126
    %v199 = vpop.permute.xlu0 %198
    %202 = vst.msk [vmem:[#allocation2] sm:$0xf] %vm58, %v197
    %203 = vst.msk [vmem:[#allocation2 + $0x4] sm:$0xf] %vm58, %v199
    %204 = vst.msk [vmem:[#allocation2] sm:$0xf] %vm63, 0
    %205 = vst.msk [vmem:[#allocation2 + $0x4] sm:$0xf] %vm63, 0
    %206 = vst.msk [vmem:[#allocation2] sm:$0xf] %vm68, 0
    %207 = vst.msk [vmem:[#allocation2 + $0x4] sm:$0xf] %vm68, 0
    %208 = vst.msk [vmem:[#allocation2 + $0x8] sm:$0xf] %vm73, %v192
    %209 = vst.msk [vmem:[#allocation2 + $0xc] sm:$0xf] %vm73, %v193
    %210 = vrot.lane.b32.xlu0 %v192, 2
    %v211 = vpop.permute.xlu0 %210
    %212 = vrot.lane.b32.xlu0 %v193, 2
    %v213 = vpop.permute.xlu0 %212
    %216 = vst.msk [vmem:[#allocation2 + $0x10] sm:$0xf] %vm90, %v211
    %217 = vst.msk [vmem:[#allocation2 + $0x14] sm:$0xf] %vm90, %v213
    %218 = vst.msk [vmem:[#allocation2 + $0x10] sm:$0xf] %vm95, 0
    %219 = vst.msk [vmem:[#allocation2 + $0x14] sm:$0xf] %vm95, 0
    %220 = vst.msk [vmem:[#allocation2 + $0x10] sm:$0xf] %vm100, 0
    %221 = vst.msk [vmem:[#allocation2 + $0x14] sm:$0xf] %vm100, 0
    %v222 = vld [vmem:[%s3] sm:$0xf]
    %v223 = vld [vmem:[%s3 + $0x4] sm:$0xf]
    %v224 = vld [vmem:[%s4] sm:$0xff]
    %v225 = vld [vmem:[%s4 + $0x8] sm:$0xff]
    %v226 = vld [vmem:[#allocation2] sm:$0xf]
    %v227 = vld [vmem:[#allocation2 + $0x4] sm:$0xf]
    %v228 = vld [vmem:[#allocation2 + $0x8] sm:$0xf]
    %v229 = vld [vmem:[#allocation2 + $0xc] sm:$0xf]
    %v230 = vld [vmem:[#allocation2 + $0x10] sm:$0xf]
    %v231 = vld [vmem:[#allocation2 + $0x14] sm:$0xf]
    %233 = vset.pattern.permute.xlu0 0
    %234 = vperm.xlu0 %233, %v224
    %v235 = vpop.permute.xlu0 %234
    %238 = vset.pattern.permute.xlu0 0
    %239 = vperm.xlu0 %238, %v225
    %v240 = vpop.permute.xlu0 %239
    %v244 = vunpack.c.l.b16 %v222
    %v245 = vunpack.c.l.b16 %v223
    %v246 = vpack.c.b16 %v245, %v244
    %v253 = vunpack.c.l.b16 %v226
    %v254 = vunpack.c.l.b16 %v227
    %v255 = vunpack.c.l.b16 %v228
    %v256 = vunpack.c.l.b16 %v229
    %v257 = vunpack.c.l.b16 %v230
    %v258 = vunpack.c.l.b16 %v231
    %v259 = vpack.c.b16 %v254, %v253
    %v260 = vpack.c.b16 %v256, %v255
    %v261 = vpack.c.b16 %v258, %v257
    %vm265 = vcmask 392192
    %v267 = vsel %vm265, %v246, 0
    %269 = vmatpush.bf16.msra.mxu0 0
    %270 = vmatpush.bf16.msra.mxu0 0
    %271 = vmatpush.bf16.msra.mxu0 0
    %272 = vmatpush.bf16.msra.mxu0 0
    %273 = vmatpush.bf16.msra.mxu0 0
    %274 = vmatpush.bf16.msra.mxu0 %v261
    %275 = vmatpush.bf16.msra.mxu0 %v260
    %276 = vmatpush.bf16.msra.mxu0 %v259
    %277 = vmatmul.bf16.gmra.mxu0 %v267
    %v278 = vpop.f32.mrf.mxu0
    %v279 = vadd.f32 %v235, %v278
    %v280 = vpop.f32.mrf.mxu0
    %v281 = vadd.f32 %v240, %v280
    %282 = vdwg.mxu0
    %v283 = vmax.f32 %v279, 0.0
    %v284 = vmax.f32 %v281, 0.0
    %v285 = vpack.c.bf16 %v283, %v283
    %v286 = vpack.c.bf16 %v284, %v284
    %289 = vrot.lane.b32.xlu0 %v285, 127
    %v290 = vpop.permute.xlu0 %289
    %291 = vrot.lane.b32.xlu0 %v286, 127
    %v292 = vpop.permute.xlu0 %291
    %vm295 = vcmask 248832
    %296 = vst.msk [vmem:[#allocation2] sm:$0xf] %vm295, %v290
    %297 = vst.msk [vmem:[#allocation2 + $0x4] sm:$0xf] %vm295, %v292
    %vm298 = vcmask 126072
    %299 = vst.msk [vmem:[#allocation2] sm:$0xf] %vm298, 0
    %300 = vst.msk [vmem:[#allocation2 + $0x4] sm:$0xf] %vm298, 0
    %vm301 = vcmask 257272
    %302 = vst.msk [vmem:[#allocation2] sm:$0xf] %vm301, 0
    %303 = vst.msk [vmem:[#allocation2 + $0x4] sm:$0xf] %vm301, 0
    %304 = vst.msk [vmem:[#allocation2 + $0x8] sm:$0xf] %vm73, %v285
    %305 = vst.msk [vmem:[#allocation2 + $0xc] sm:$0xf] %vm73, %v286
    %306 = vrot.lane.b32.xlu0 %v285, 1
    %v307 = vpop.permute.xlu0 %306
    %308 = vrot.lane.b32.xlu0 %v286, 1
    %v309 = vpop.permute.xlu0 %308
    %vm312 = vcmask 257032
    %313 = vst.msk [vmem:[#allocation2 + $0x10] sm:$0xf] %vm312, %v307
    %314 = vst.msk [vmem:[#allocation2 + $0x14] sm:$0xf] %vm312, %v309
    %vm315 = vcmask 3072
    %316 = vst.msk [vmem:[#allocation2 + $0x10] sm:$0xf] %vm315, 0
    %317 = vst.msk [vmem:[#allocation2 + $0x14] sm:$0xf] %vm315, 0
    %vm318 = vcmask 134272
    %319 = vst.msk [vmem:[#allocation2 + $0x10] sm:$0xf] %vm318, 0
    %320 = vst.msk [vmem:[#allocation2 + $0x14] sm:$0xf] %vm318, 0
    %v321 = vld [vmem:[%s5] sm:$0xf]
    %v322 = vld [vmem:[%s5 + $0x4] sm:$0xf]
    %v323 = vld [vmem:[%s6] sm:$0xff]
    %v324 = vld [vmem:[%s6 + $0x8] sm:$0xff]
    %v325 = vld [vmem:[#allocation2] sm:$0xf]
    %v326 = vld [vmem:[#allocation2 + $0x4] sm:$0xf]
    %v327 = vld [vmem:[#allocation2 + $0x8] sm:$0xf]
    %v328 = vld [vmem:[#allocation2 + $0xc] sm:$0xf]
    %v329 = vld [vmem:[#allocation2 + $0x10] sm:$0xf]
    %v330 = vld [vmem:[#allocation2 + $0x14] sm:$0xf]
    %332 = vset.pattern.permute.xlu0 0
    %333 = vperm.xlu0 %332, %v323
    %v334 = vpop.permute.xlu0 %333
    %337 = vset.pattern.permute.xlu0 0
    %338 = vperm.xlu0 %337, %v324
    %v339 = vpop.permute.xlu0 %338
    %v343 = vunpack.c.l.b16 %v321
    %v344 = vunpack.c.l.b16 %v322
    %v345 = vpack.c.b16 %v344, %v343
    %v352 = vunpack.c.l.b16 %v325
    %v353 = vunpack.c.l.b16 %v326
    %v354 = vunpack.c.l.b16 %v327
    %v355 = vunpack.c.l.b16 %v328
    %v356 = vunpack.c.l.b16 %v329
    %v357 = vunpack.c.l.b16 %v330
    %v358 = vpack.c.b16 %v353, %v352
    %v359 = vpack.c.b16 %v355, %v354
    %v360 = vpack.c.b16 %v357, %v356
    %v365 = vsel %vm265, %v345, 0
    %367 = vmatpush.bf16.msra.mxu0 0
    %368 = vmatpush.bf16.msra.mxu0 0
    %369 = vmatpush.bf16.msra.mxu0 0
    %370 = vmatpush.bf16.msra.mxu0 0
    %371 = vmatpush.bf16.msra.mxu0 0
    %372 = vmatpush.bf16.msra.mxu0 %v360
    %373 = vmatpush.bf16.msra.mxu0 %v359
    %374 = vmatpush.bf16.msra.mxu0 %v358
    %375 = vmatmul.bf16.gmra.mxu0 %v365
    %v376 = vpop.f32.mrf.mxu0
    %v377 = vadd.f32 %v334, %v376
    %v378 = vpop.f32.mrf.mxu0
    %v379 = vadd.f32 %v339, %v378
    %380 = vdwg.mxu0
    %v381 = vmax.f32 %v377, 0.0
    %v382 = vmax.f32 %v379, 0.0
    %v383 = vpack.c.bf16 %v381, %v381
    %v384 = vpack.c.bf16 %v382, %v382
    %387 = vrot.lane.b32.xlu0 %v383, 127
    %v388 = vpop.permute.xlu0 %387
    %389 = vrot.lane.b32.xlu0 %v384, 127
    %v390 = vpop.permute.xlu0 %389
    %393 = vst.msk [vmem:[#allocation2] sm:$0xf] %vm295, %v388
    %394 = vst.msk [vmem:[#allocation2 + $0x4] sm:$0xf] %vm295, %v390
    %395 = vst.msk [vmem:[#allocation2] sm:$0xf] %vm298, 0
    %396 = vst.msk [vmem:[#allocation2 + $0x4] sm:$0xf] %vm298, 0
    %397 = vst.msk [vmem:[#allocation2] sm:$0xf] %vm301, 0
    %398 = vst.msk [vmem:[#allocation2 + $0x4] sm:$0xf] %vm301, 0
    %399 = vst.msk [vmem:[#allocation2 + $0x8] sm:$0xf] %vm73, %v383
    %400 = vst.msk [vmem:[#allocation2 + $0xc] sm:$0xf] %vm73, %v384
    %401 = vrot.lane.b32.xlu0 %v383, 1
    %v402 = vpop.permute.xlu0 %401
    %403 = vrot.lane.b32.xlu0 %v384, 1
    %v404 = vpop.permute.xlu0 %403
    %407 = vst.msk [vmem:[#allocation2 + $0x10] sm:$0xf] %vm312, %v402
    %408 = vst.msk [vmem:[#allocation2 + $0x14] sm:$0xf] %vm312, %v404
    %409 = vst.msk [vmem:[#allocation2 + $0x10] sm:$0xf] %vm315, 0
    %410 = vst.msk [vmem:[#allocation2 + $0x14] sm:$0xf] %vm315, 0
    %411 = vst.msk [vmem:[#allocation2 + $0x10] sm:$0xf] %vm318, 0
    %412 = vst.msk [vmem:[#allocation2 + $0x14] sm:$0xf] %vm318, 0
    %v413 = vld [vmem:[%s7] sm:$0xf]
    %v414 = vld [vmem:[%s8] sm:$0xff]
    %v415 = vld [vmem:[#allocation2] sm:$0xf]
    %v416 = vld [vmem:[#allocation2 + $0x4] sm:$0xf]
    %v417 = vld [vmem:[#allocation2 + $0x8] sm:$0xf]
    %v418 = vld [vmem:[#allocation2 + $0xc] sm:$0xf]
    %v419 = vld [vmem:[#allocation2 + $0x10] sm:$0xf]
    %v420 = vld [vmem:[#allocation2 + $0x14] sm:$0xf]
    %422 = vset.pattern.permute.xlu0 0
    %423 = vperm.xlu0 %422, %v414
    %v424 = vpop.permute.xlu0 %423
    %v432 = vunpack.c.l.b16 %v415
    %v433 = vunpack.c.l.b16 %v416
    %v434 = vunpack.c.l.b16 %v417
    %v435 = vunpack.c.l.b16 %v418
    %v436 = vunpack.c.l.b16 %v419
    %v437 = vunpack.c.l.b16 %v420
    %v438 = vpack.c.b16 %v433, %v432
    %v439 = vpack.c.b16 %v435, %v434
    %v440 = vpack.c.b16 %v437, %v436
    %v445 = vsel %vm265, %v413, 0
    %447 = vmatpush.bf16.msra.mxu0 0
    %448 = vmatpush.bf16.msra.mxu0 0
    %449 = vmatpush.bf16.msra.mxu0 0
    %450 = vmatpush.bf16.msra.mxu0 0
    %451 = vmatpush.bf16.msra.mxu0 0
    %452 = vmatpush.bf16.msra.mxu0 %v440
    %453 = vmatpush.bf16.msra.mxu0 %v439
    %454 = vmatpush.bf16.msra.mxu0 %v438
    %455 = vmatmul.bf16.gmra.mxu0 %v445
    %v456 = vpop.f32.mrf.mxu0
    %v457 = vadd.f32 %v424, %v456
    %v458 = vpop.f32.mrf.mxu0
    %459 = vdwg.mxu0
    %vm460 = vcmask 261120
    %461 = vst.msk [vmem:[#allocation3] sm:$0xff] %vm460, %v457
    // Predicated region
    $region38: #{tpu_custom_call.1} parent=1 // pred_check
      _
    $region39: #{tpu_custom_call.1} parent=1 // pred_check_branch
      %463 = sbr.rel (0) target = $region41
    $region40: #{tpu_custom_call.1} parent=1 // pred_region
      %465 = vsyncadd [#allocation4], 0
      %s467 = sshll.u32 [#allocation3], 4
      %s468 = int_to_ptr.vmem [resolvable:$true] %s467
      %s469 = sshll.u32 %s9, 4
      %s470 = int_to_ptr.hbm [resolvable:$true] %s469
      %472 = dma.vmem_to_hbm [thread:$0]  %s468, 128, %s470, [#allocation4]
    $region41: #{tpu_custom_call.1} parent=1 // pred_fallthru
      _
    // Predicated region
    $region42: #{tpu_custom_call.1} parent=1 // pred_check
      _
    $region43: #{tpu_custom_call.1} parent=1 // pred_check_branch
      %474 = sbr.rel (0) target = $region45
    $region44: #{tpu_custom_call.1} parent=1 // pred_region
      %476 = dma.done [#allocation4], 128
    $region45: #{tpu_custom_call.1} parent=1 // pred_fallthru
      _
    %477 = vsyncpa [#allocation4], 1

</llo_original>
